<compile_context>
chip_gen: v7x
topology: tpu7x:2x2x1
jax: 0.10.0
libtpu: 0.0.40
codegen_flags: <defaults>
</compile_context>

<pallas_src>
import functools

import jax
import jax.numpy as jnp
from jax.experimental import pallas as pl
from jax.experimental.pallas import tpu as pltpu

LOG_STD_MAX = 2.0
LOG_STD_MIN = -5.0
_LS_SCALE = 0.5 * (LOG_STD_MAX - LOG_STD_MIN)           # folded affine: A*tanh(z)+B
_LS_SHIFT = LOG_STD_MIN + _LS_SCALE


def actor_kernel(x_ref, w1_ref, b1_ref, w2_ref, b2_ref, wh_ref, bh_ref,
                 out_ref, *, obs_dim, act_dim):
    x = x_ref[...]                                        # (TB, obs_dim) f32

    # ---- fc1 + relu ------------------------------------------------------
    if obs_dim <= 8:
        # Tiny K: obs_dim broadcast-FMAs on the VPU, skip the padded MXU pass.
        h1 = x[:, 0:1] * w1_ref[0:1, :]
        for k in range(1, obs_dim):
            h1 = h1 + x[:, k:k + 1] * w1_ref[k:k + 1, :]
        h1 = h1 + b1_ref[...]
    else:
        h1 = jnp.dot(x, w1_ref[...], preferred_element_type=jnp.float32) + b1_ref[...]
    h1 = jnp.maximum(h1, 0.0)                             # f32 (TB, H)

    # ---- fc2 + relu (bf16 inputs, f32 accumulate) ------------------------
    h2 = jnp.dot(h1.astype(jnp.bfloat16), w2_ref[...],
                 preferred_element_type=jnp.float32)
    h2 = jnp.maximum(h2 + b2_ref[...], 0.0)               # f32 (TB, H)

    # ---- fused heads: [mean | log_std_raw] in one MXU pass ---------------
    heads = jnp.dot(h2.astype(jnp.bfloat16), wh_ref[...],
                    preferred_element_type=jnp.float32) + bh_ref[...]

    # log_std = A * tanh(z) + B  (tanh on EUP; single VPU FMA)
    ls = _LS_SCALE * jnp.tanh(heads) + _LS_SHIFT
    lane = jax.lax.broadcasted_iota(jnp.int32, heads.shape, dimension=1)
    out_ref[...] = jnp.where(lane < act_dim, heads, ls)   # [mean | log_std]

    # TODO(synk): get_action()'s reparameterized-normal sampling / tanh-squash /
    # log_prob math could be fused here as extra VPU/EUP epilogue work to
    # amortize the per-call launch cost at small batch sizes.


def pack_params(p):
    """One-time packing/casting of PyTorch-style params for the kernel."""
    return dict(
        w1=p["w1"].astype(jnp.float32),                   # tiny, used on VPU path
        b1=p["b1"].astype(jnp.float32),
        w2=p["w2"].astype(jnp.bfloat16),                  # dominant bytes -> bf16
        b2=p["b2"].astype(jnp.float32),
        wh=jnp.concatenate([p["wm"], p["ws"]], axis=1).astype(jnp.bfloat16),
        bh=jnp.concatenate([p["bm"], p["bs"]], axis=1).astype(jnp.float32),
    )


def _pick_tb(B):
    for tb in (512, 256, 128, 64, 32, 16, 8):
        if B % tb == 0:
            return tb
    return B                                              # tiny batch: one block


def actor_forward(x, pp):
    """x: (B, obs_dim) f32. pp: output of pack_params(). Returns (mean, log_std)."""
    B, obs_dim = x.shape
    act_dim = pp["wh"].shape[1] // 2
    TB = _pick_tb(B)
    grid = (B // TB,)

    kernel = functools.partial(actor_kernel, obs_dim=obs_dim, act_dim=act_dim)
    const = lambda a: pl.BlockSpec(a.shape, lambda i: (0, 0))  # weights stay resident

    out = pl.pallas_call(
        kernel,
        out_shape=jax.ShapeDtypeStruct((B, 2 * act_dim), jnp.float32),
        grid=grid,
        in_specs=[
            pl.BlockSpec((TB, obs_dim), lambda i: (i, 0)),     # batch-tiled x
            const(pp["w1"]), const(pp["b1"]),
            const(pp["w2"]), const(pp["b2"]),
            const(pp["wh"]), const(pp["bh"]),
        ],
        out_specs=pl.BlockSpec((TB, 2 * act_dim), lambda i: (i, 0)),
        compiler_params=pltpu.CompilerParams(
            dimension_semantics=("parallel",)),
    )(x, pp["w1"], pp["b1"], pp["w2"], pp["b2"], pp["wh"], pp["bh"])

    mean = out[:, :act_dim]
    log_std = out[:, act_dim:]
    return mean, log_std


def init_params(key, obs_dim, hidden, act_dim):
    """Deterministic PyTorch-style uniform(-1/sqrt(fan_in), 1/sqrt(fan_in)) init."""
    def linear(k, fan_in, fan_out):
        kw, kb = jax.random.split(k)
        bound = 1.0 / jnp.sqrt(float(fan_in))
        w = jax.random.uniform(kw, (fan_in, fan_out), jnp.float32, -bound, bound)
        b = jax.random.uniform(kb, (1, fan_out), jnp.float32, -bound, bound)
        return w, b

    k1, k2, k3, k4 = jax.random.split(key, 4)
    w1, b1 = linear(k1, obs_dim, hidden)
    w2, b2 = linear(k2, hidden, hidden)
    wm, bm = linear(k3, hidden, act_dim)
    ws, bs = linear(k4, hidden, act_dim)
    return dict(w1=w1, b1=b1, w2=w2, b2=b2, wm=wm, bm=bm, ws=ws, bs=bs)


def actor_forward_ref_f32(x, p):
    """Pure-f32 reference (matches the PyTorch module math exactly)."""
    h1 = jnp.maximum(x @ p["w1"] + p["b1"], 0.0)
    h2 = jnp.maximum(h1 @ p["w2"] + p["b2"], 0.0)
    mean = h2 @ p["wm"] + p["bm"]
    ls = jnp.tanh(h2 @ p["ws"] + p["bs"])
    ls = LOG_STD_MIN + 0.5 * (LOG_STD_MAX - LOG_STD_MIN) * (ls + 1.0)
    return mean, ls


def actor_forward_ref_bf16(x, p):
    """Reference that mirrors the kernel's bf16 cast points exactly."""
    h1 = jnp.maximum(x @ p["w1"] + p["b1"], 0.0)
    h2 = jnp.dot(h1.astype(jnp.bfloat16), p["w2"].astype(jnp.bfloat16),
                 preferred_element_type=jnp.float32) + p["b2"]
    h2 = jnp.maximum(h2, 0.0)
    wh = jnp.concatenate([p["wm"], p["ws"]], axis=1).astype(jnp.bfloat16)
    bh = jnp.concatenate([p["bm"], p["bs"]], axis=1)
    heads = jnp.dot(h2.astype(jnp.bfloat16), wh,
                    preferred_element_type=jnp.float32) + bh
    act_dim = p["wm"].shape[1]
    mean = heads[:, :act_dim]
    ls = LOG_STD_MIN + 0.5 * (LOG_STD_MAX - LOG_STD_MIN) * (
        jnp.tanh(heads[:, act_dim:]) + 1.0)
    return mean, ls


if __name__ == "__main__":
    # CartPole-like env: obs_dim = 4, act_dim = 1 (continuous SAC variant).
    B, OBS, HID, ACT = 8, 4, 512, 1

    key = jax.random.PRNGKey(0)
    kx, kp = jax.random.split(key)
    x = jax.random.normal(kx, (B, OBS), jnp.float32)
    params = init_params(kp, OBS, HID, ACT)
    packed = pack_params(params)

    mean, log_std = actor_forward(x, packed)
    jax.block_until_ready((mean, log_std))

    # Tight check against a reference that casts to bf16 at the same points.
    mean_m, ls_m = actor_forward_ref_bf16(x, params)
    assert jnp.allclose(mean, mean_m, atol=2e-3, rtol=2e-3)
    assert jnp.allclose(log_std, ls_m, atol=2e-3, rtol=2e-3)

    # Loose sanity check against the exact f32 PyTorch-equivalent math.
    mean_f, ls_f = actor_forward_ref_f32(x, params)
    assert jnp.allclose(mean, mean_f, atol=5e-2, rtol=5e-2)
    assert jnp.allclose(log_std, ls_f, atol=5e-2, rtol=5e-2)

    print("KERNEL_OK")
</pallas_src>

<mosaic_0001>
module attributes {stable_mosaic.version = 11 : i64} {
  func.func @actor_kernel(%arg0: i32, %arg1: memref<8x4xf32, #tpu.memory_space<vmem>>, %arg2: memref<4x512xf32, #tpu.memory_space<vmem>>, %arg3: memref<1x512xf32, #tpu.memory_space<vmem>>, %arg4: memref<512x512xbf16, #tpu.memory_space<vmem>>, %arg5: memref<1x512xf32, #tpu.memory_space<vmem>>, %arg6: memref<512x2xbf16, #tpu.memory_space<vmem>>, %arg7: memref<1x2xf32, #tpu.memory_space<vmem>>, %arg8: memref<8x2xf32, #tpu.memory_space<vmem>>) attributes {dimension_semantics = [#tpu.dimension_semantics<parallel>], iteration_bounds = array<i64: 1>, scalar_prefetch = 0 : i64, scratch_operands = 0 : i64, tpu.core_type = #tpu.core_type<tc>, window_params = [{transform_indices = @transform_0, window_bounds = array<i64: 8, 4>}, {pipeline_mode = #tpu.pipeline_mode<synchronous>, transform_indices = @transform_1, window_bounds = array<i64: 4, 512>}, {pipeline_mode = #tpu.pipeline_mode<synchronous>, transform_indices = @transform_2, window_bounds = array<i64: 1, 512>}, {pipeline_mode = #tpu.pipeline_mode<synchronous>, transform_indices = @transform_3, window_bounds = array<i64: 512, 512>}, {pipeline_mode = #tpu.pipeline_mode<synchronous>, transform_indices = @transform_4, window_bounds = array<i64: 1, 512>}, {pipeline_mode = #tpu.pipeline_mode<synchronous>, transform_indices = @transform_5, window_bounds = array<i64: 512, 2>}, {pipeline_mode = #tpu.pipeline_mode<synchronous>, transform_indices = @transform_6, window_bounds = array<i64: 1, 2>}, {transform_indices = @transform_7, window_bounds = array<i64: 8, 2>}]} {
    %c0 = arith.constant 0 : index
    %c0_0 = arith.constant 0 : index
    %0 = vector.load %arg1[%c0, %c0_0] : memref<8x4xf32, #tpu.memory_space<vmem>>, vector<8x4xf32>
    %1 = vector.extract_strided_slice %0 {offsets = [0, 0], sizes = [8, 1], strides = [1, 1]} : vector<8x4xf32> to vector<8x1xf32>
    %c0_1 = arith.constant 0 : index
    %c0_2 = arith.constant 0 : index
    %2 = vector.load %arg2[%c0_1, %c0_2] : memref<4x512xf32, #tpu.memory_space<vmem>>, vector<1x512xf32>
    %3 = vector.broadcast %1 : vector<8x1xf32> to vector<8x512xf32>
    %4 = vector.broadcast %2 : vector<1x512xf32> to vector<8x512xf32>
    %5 = arith.mulf %3, %4 : vector<8x512xf32>
    %6 = vector.extract_strided_slice %0 {offsets = [0, 1], sizes = [8, 1], strides = [1, 1]} : vector<8x4xf32> to vector<8x1xf32>
    %c1 = arith.constant 1 : index
    %c0_3 = arith.constant 0 : index
    %7 = vector.load %arg2[%c1, %c0_3] : memref<4x512xf32, #tpu.memory_space<vmem>>, vector<1x512xf32>
    %8 = vector.broadcast %6 : vector<8x1xf32> to vector<8x512xf32>
    %9 = vector.broadcast %7 : vector<1x512xf32> to vector<8x512xf32>
    %10 = arith.mulf %8, %9 : vector<8x512xf32>
    %11 = arith.addf %5, %10 : vector<8x512xf32>
    %12 = vector.extract_strided_slice %0 {offsets = [0, 2], sizes = [8, 1], strides = [1, 1]} : vector<8x4xf32> to vector<8x1xf32>
    %c2 = arith.constant 2 : index
    %c0_4 = arith.constant 0 : index
    %13 = vector.load %arg2[%c2, %c0_4] : memref<4x512xf32, #tpu.memory_space<vmem>>, vector<1x512xf32>
    %14 = vector.broadcast %12 : vector<8x1xf32> to vector<8x512xf32>
    %15 = vector.broadcast %13 : vector<1x512xf32> to vector<8x512xf32>
    %16 = arith.mulf %14, %15 : vector<8x512xf32>
    %17 = arith.addf %11, %16 : vector<8x512xf32>
    %18 = vector.extract_strided_slice %0 {offsets = [0, 3], sizes = [8, 1], strides = [1, 1]} : vector<8x4xf32> to vector<8x1xf32>
    %c3 = arith.constant 3 : index
    %c0_5 = arith.constant 0 : index
    %19 = vector.load %arg2[%c3, %c0_5] : memref<4x512xf32, #tpu.memory_space<vmem>>, vector<1x512xf32>
    %20 = vector.broadcast %18 : vector<8x1xf32> to vector<8x512xf32>
    %21 = vector.broadcast %19 : vector<1x512xf32> to vector<8x512xf32>
    %22 = arith.mulf %20, %21 : vector<8x512xf32>
    %23 = arith.addf %17, %22 : vector<8x512xf32>
    %c0_6 = arith.constant 0 : index
    %c0_7 = arith.constant 0 : index
    %24 = vector.load %arg3[%c0_6, %c0_7] : memref<1x512xf32, #tpu.memory_space<vmem>>, vector<1x512xf32>
    %25 = vector.broadcast %24 : vector<1x512xf32> to vector<8x512xf32>
    %26 = arith.addf %23, %25 : vector<8x512xf32>
    %cst = arith.constant 0.000000e+00 : f32
    %27 = vector.broadcast %cst : f32 to vector<8x512xf32>
    %28 = arith.maximumf %26, %27 : vector<8x512xf32>
    %29 = arith.truncf %28 : vector<8x512xf32> to vector<8x512xbf16>
    %c0_8 = arith.constant 0 : index
    %c0_9 = arith.constant 0 : index
    %30 = vector.load %arg4[%c0_8, %c0_9] : memref<512x512xbf16, #tpu.memory_space<vmem>>, vector<512x512xbf16>
    %cst_10 = arith.constant dense<0.000000e+00> : vector<8x512xf32>
    %31 = tpu.matmul %29, %30, %cst_10 {dimension_numbers = #tpu.dot_dimension_numbers<[1], [0], [0], [1], [0, 0, 1, 1], [], []>} : vector<8x512xbf16>, vector<512x512xbf16>, vector<8x512xf32> -> vector<8x512xf32>
    %c0_11 = arith.constant 0 : index
    %c0_12 = arith.constant 0 : index
    %32 = vector.load %arg5[%c0_11, %c0_12] : memref<1x512xf32, #tpu.memory_space<vmem>>, vector<1x512xf32>
    %33 = vector.broadcast %32 : vector<1x512xf32> to vector<8x512xf32>
    %34 = arith.addf %31, %33 : vector<8x512xf32>
    %cst_13 = arith.constant 0.000000e+00 : f32
    %35 = vector.broadcast %cst_13 : f32 to vector<8x512xf32>
    %36 = arith.maximumf %34, %35 : vector<8x512xf32>
    %37 = arith.truncf %36 : vector<8x512xf32> to vector<8x512xbf16>
    %c0_14 = arith.constant 0 : index
    %c0_15 = arith.constant 0 : index
    %38 = vector.load %arg6[%c0_14, %c0_15] : memref<512x2xbf16, #tpu.memory_space<vmem>>, vector<512x2xbf16>
    %cst_16 = arith.constant dense<0.000000e+00> : vector<8x2xf32>
    %39 = tpu.matmul %37, %38, %cst_16 {dimension_numbers = #tpu.dot_dimension_numbers<[1], [0], [0], [1], [0, 0, 1, 1], [], []>} : vector<8x512xbf16>, vector<512x2xbf16>, vector<8x2xf32> -> vector<8x2xf32>
    %c0_17 = arith.constant 0 : index
    %c0_18 = arith.constant 0 : index
    %40 = vector.load %arg7[%c0_17, %c0_18] : memref<1x2xf32, #tpu.memory_space<vmem>>, vector<1x2xf32>
    %41 = vector.broadcast %40 : vector<1x2xf32> to vector<8x2xf32>
    %42 = arith.addf %39, %41 : vector<8x2xf32>
    %43 = math.tanh %42 : vector<8x2xf32>
    %cst_19 = arith.constant 3.500000e+00 : f32
    %44 = vector.broadcast %cst_19 : f32 to vector<8x2xf32>
    %45 = arith.mulf %44, %43 : vector<8x2xf32>
    %cst_20 = arith.constant -1.500000e+00 : f32
    %46 = vector.broadcast %cst_20 : f32 to vector<8x2xf32>
    %47 = arith.addf %45, %46 : vector<8x2xf32>
    %48 = tpu.iota {dimensions = array<i32: 1>} : vector<8x2xi32>
    %c1_i32 = arith.constant 1 : i32
    %49 = vector.broadcast %c1_i32 : i32 to vector<8x2xi32>
    %50 = arith.cmpi slt, %48, %49 : vector<8x2xi32>
    %51 = arith.select %50, %42, %47 : vector<8x2xi1>, vector<8x2xf32>
    %c0_21 = arith.constant 0 : index
    %c0_22 = arith.constant 0 : index
    %52 = vector.load %arg8[%c0_21, %c0_22] : memref<8x2xf32, #tpu.memory_space<vmem>>, vector<8x2xf32>
    tpu.vector_store %arg8[%c0_21, %c0_22], %51 {strides = array<i32>} : memref<8x2xf32, #tpu.memory_space<vmem>>, vector<8x2xf32>,
    return
  }
  func.func @transform_0(%arg0: i32) -> (i32, i32) {
    %c0_i32 = arith.constant 0 : i32
    %c0_i32_0 = arith.constant 0 : i32
    return %arg0, %c0_i32 : i32, i32
  }
  func.func @transform_1(%arg0: i32) -> (i32, i32) {
    %c0_i32 = arith.constant 0 : i32
    %c0_i32_0 = arith.constant 0 : i32
    %c0_i32_1 = arith.constant 0 : i32
    return %c0_i32, %c0_i32_0 : i32, i32
  }
  func.func @transform_2(%arg0: i32) -> (i32, i32) {
    %c0_i32 = arith.constant 0 : i32
    %c0_i32_0 = arith.constant 0 : i32
    %c0_i32_1 = arith.constant 0 : i32
    return %c0_i32, %c0_i32_0 : i32, i32
  }
  func.func @transform_3(%arg0: i32) -> (i32, i32) {
    %c0_i32 = arith.constant 0 : i32
    %c0_i32_0 = arith.constant 0 : i32
    %c0_i32_1 = arith.constant 0 : i32
    return %c0_i32, %c0_i32_0 : i32, i32
  }
  func.func @transform_4(%arg0: i32) -> (i32, i32) {
    %c0_i32 = arith.constant 0 : i32
    %c0_i32_0 = arith.constant 0 : i32
    %c0_i32_1 = arith.constant 0 : i32
    return %c0_i32, %c0_i32_0 : i32, i32
  }
  func.func @transform_5(%arg0: i32) -> (i32, i32) {
    %c0_i32 = arith.constant 0 : i32
    %c0_i32_0 = arith.constant 0 : i32
    %c0_i32_1 = arith.constant 0 : i32
    return %c0_i32, %c0_i32_0 : i32, i32
  }
  func.func @transform_6(%arg0: i32) -> (i32, i32) {
    %c0_i32 = arith.constant 0 : i32
    %c0_i32_0 = arith.constant 0 : i32
    %c0_i32_1 = arith.constant 0 : i32
    return %c0_i32, %c0_i32_0 : i32, i32
  }
  func.func @transform_7(%arg0: i32) -> (i32, i32) {
    %c0_i32 = arith.constant 0 : i32
    %c0_i32_0 = arith.constant 0 : i32
    return %arg0, %c0_i32 : i32, i32
  }
}

</mosaic_0001>

<llo_original>
// kernel: tpu_custom_call.1
$region0: #{tpu_custom_call.1}
  #allocation0 [shape = 'u32[]', space=smem, size = 0x4, offset = 0x4, fixed_abs, tag = 'smem constant byte address 0x4 - core index']
  #allocation1 [shape = 'u32[144,128]{1,0:T(1,128)}', space=vmem, size = 0x12000, scoped, tag = 'internal scratch']
  %s0 = inlined_call_operand.vmem [shape: f32[8,4], index: 0, kind: input, shape index: {}]
  %s1 = inlined_call_operand.vmem [shape: f32[4,512], index: 1, kind: input, shape index: {}]
  %s2 = inlined_call_operand.vmem [shape: f32[1,512], index: 2, kind: input, shape index: {}]
  %s3 = inlined_call_operand.hbm [shape: bf16[512,512], index: 3, kind: input, shape index: {}]
  %s4 = inlined_call_operand.vmem [shape: f32[1,512], index: 4, kind: input, shape index: {}]
  %s5 = inlined_call_operand.vmem [shape: bf16[512,2], index: 5, kind: input, shape index: {}]
  %s6 = inlined_call_operand.vmem [shape: f32[1,2], index: 6, kind: input, shape index: {}]
  %s7 = inlined_call_operand.vmem [shape: f32[8,2], index: 7, kind: output, shape index: {}]
  %s8 = sld [smem:[#allocation0]]
  $region42: #{tpu_custom_call.1} parent=0
    _
  %s10 = ssub.s32 1, %s8
  %s11 = scalar_select 0, %s10, %s8
  $region1: #{tpu_custom_call.1} parent=0
    #allocation2 [shape = 'u8[524288]{0}', space=vmem, size = 0x80000, scoped, tag = 'input window, operand 3, single buffered']
    #allocation3 [shape = 's32[1]{0}', space=sflag, size = 0x4, scoped, tag = 'scoped memory for tpu_custom_call.1']
    %12 = vsyncpa [#allocation3], 0
    // Predicated region
    $region2: #{tpu_custom_call.1} parent=1 // pred_check
      _
    $region3: #{tpu_custom_call.1} parent=1 // pred_check_branch
      %14 = sbr.rel (0) target = $region5
    $region4: #{tpu_custom_call.1} parent=1 // pred_region
      _
    $region5: #{tpu_custom_call.1} parent=1 // pred_fallthru
      _
    // Predicated region
    $region6: #{tpu_custom_call.1} parent=1 // pred_check
      _
    $region7: #{tpu_custom_call.1} parent=1 // pred_check_branch
      %16 = sbr.rel (0) target = $region9
    $region8: #{tpu_custom_call.1} parent=1 // pred_region
      _
    $region9: #{tpu_custom_call.1} parent=1 // pred_fallthru
      _
    // Predicated region
    $region10: #{tpu_custom_call.1} parent=1 // pred_check
      _
    $region11: #{tpu_custom_call.1} parent=1 // pred_check_branch
      %18 = sbr.rel (0) target = $region13
    $region12: #{tpu_custom_call.1} parent=1 // pred_region
      _
    $region13: #{tpu_custom_call.1} parent=1 // pred_fallthru
      _
    // Predicated region
    $region14: #{tpu_custom_call.1} parent=1 // pred_check
      _
    $region15: #{tpu_custom_call.1} parent=1 // pred_check_branch
      %20 = sbr.rel (0) target = $region17
    $region16: #{tpu_custom_call.1} parent=1 // pred_region
      %s22 = ssub.s32 16384, 16384
      %23 = vsyncadd [#allocation3], %s22
      %s24 = sshll.u32 [#allocation2], 4
      %s25 = int_to_ptr.vmem [resolvable:$true] %s24
      %30 = dma.hbm_to_vmem [thread:$0]  %s3, 16384, %s25, [#allocation3], 256, 256, 16
    $region17: #{tpu_custom_call.1} parent=1 // pred_fallthru
      _
    // Predicated region
    $region18: #{tpu_custom_call.1} parent=1 // pred_check
      _
    $region19: #{tpu_custom_call.1} parent=1 // pred_check_branch
      %32 = sbr.rel (0) target = $region21
    $region20: #{tpu_custom_call.1} parent=1 // pred_region
      _
    $region21: #{tpu_custom_call.1} parent=1 // pred_fallthru
      _
    // Predicated region
    $region22: #{tpu_custom_call.1} parent=1 // pred_check
      _
    $region23: #{tpu_custom_call.1} parent=1 // pred_check_branch
      %34 = sbr.rel (0) target = $region25
    $region24: #{tpu_custom_call.1} parent=1 // pred_region
      _
    $region25: #{tpu_custom_call.1} parent=1 // pred_fallthru
      _
    // Predicated region
    $region26: #{tpu_custom_call.1} parent=1 // pred_check
      _
    $region27: #{tpu_custom_call.1} parent=1 // pred_check_branch
      %36 = sbr.rel (0) target = $region29
    $region28: #{tpu_custom_call.1} parent=1 // pred_region
      _
    $region29: #{tpu_custom_call.1} parent=1 // pred_fallthru
      _
    // Predicated region
    $region30: #{tpu_custom_call.1} parent=1 // pred_check
      _
    $region31: #{tpu_custom_call.1} parent=1 // pred_check_branch
      %38 = sbr.rel (0) target = $region33
    $region32: #{tpu_custom_call.1} parent=1 // pred_region
      %39 = dma.done [#allocation3], 16384
    $region33: #{tpu_custom_call.1} parent=1 // pred_fallthru
      _
    %v41 = vld [vmem:[%s0] sm:$0xff]
    %v42 = vld [vmem:[%s1] ss:$4 sm:$0xf]
    %44 = vset.pattern.permute.xlu0 0
    %45 = vperm.xlu0 %44, %v41
    %v46 = vpop.permute.xlu0 %45
    %v49 = vlaneseq
    %v50 = vshrl.u32 %v49, 7
    %v51 = vsub.s32 0, %v50
    %v52 = vrot.slane %v42, %v51
    %v53 = vlaneseq
    %v54 = vshrl.u32 %v53, 7
    %v55 = vsub.s32 1, %v54
    %v56 = vrot.slane %v42, %v55
    %v57 = vlaneseq
    %v58 = vshrl.u32 %v57, 7
    %v59 = vsub.s32 2, %v58
    %v60 = vrot.slane %v42, %v59
    %v61 = vlaneseq
    %v62 = vshrl.u32 %v61, 7
    %v63 = vsub.s32 3, %v62
    %v64 = vrot.slane %v42, %v63
    %v69 = vmul.f32 %v46, %v52
    %v70 = vmul.f32 %v46, %v56
    %v71 = vmul.f32 %v46, %v60
    %v72 = vmul.f32 %v46, %v64
    %s73 = scalar_lea.vmem %s1, 1
    %v74 = vld [vmem:[%s73] ss:$4 sm:$0xf]
    %75 = vset.pattern.permute.xlu0 1
    %76 = vperm.xlu0 %75, %v41
    %v77 = vpop.permute.xlu0 %76
    %v80 = vlaneseq
    %v81 = vshrl.u32 %v80, 7
    %v82 = vsub.s32 0, %v81
    %v83 = vrot.slane %v74, %v82
    %v84 = vlaneseq
    %v85 = vshrl.u32 %v84, 7
    %v86 = vsub.s32 1, %v85
    %v87 = vrot.slane %v74, %v86
    %v88 = vlaneseq
    %v89 = vshrl.u32 %v88, 7
    %v90 = vsub.s32 2, %v89
    %v91 = vrot.slane %v74, %v90
    %v92 = vlaneseq
    %v93 = vshrl.u32 %v92, 7
    %v94 = vsub.s32 3, %v93
    %v95 = vrot.slane %v74, %v94
    %v100 = vmul.f32 %v77, %v83
    %v101 = vmul.f32 %v77, %v87
    %v102 = vmul.f32 %v77, %v91
    %v103 = vmul.f32 %v77, %v95
    %v104 = vadd.f32 %v69, %v100
    %v105 = vadd.f32 %v70, %v101
    %v106 = vadd.f32 %v71, %v102
    %v107 = vadd.f32 %v72, %v103
    %s108 = scalar_lea.vmem %s1, 2
    %v109 = vld [vmem:[%s108] ss:$4 sm:$0xf]
    %110 = vset.pattern.permute.xlu0 2
    %111 = vperm.xlu0 %110, %v41
    %v112 = vpop.permute.xlu0 %111
    %v115 = vlaneseq
    %v116 = vshrl.u32 %v115, 7
    %v117 = vsub.s32 0, %v116
    %v118 = vrot.slane %v109, %v117
    %v119 = vlaneseq
    %v120 = vshrl.u32 %v119, 7
    %v121 = vsub.s32 1, %v120
    %v122 = vrot.slane %v109, %v121
    %v123 = vlaneseq
    %v124 = vshrl.u32 %v123, 7
    %v125 = vsub.s32 2, %v124
    %v126 = vrot.slane %v109, %v125
    %v127 = vlaneseq
    %v128 = vshrl.u32 %v127, 7
    %v129 = vsub.s32 3, %v128
    %v130 = vrot.slane %v109, %v129
    %v135 = vmul.f32 %v112, %v118
    %v136 = vmul.f32 %v112, %v122
    %v137 = vmul.f32 %v112, %v126
    %v138 = vmul.f32 %v112, %v130
    %v139 = vadd.f32 %v104, %v135
    %v140 = vadd.f32 %v105, %v136
    %v141 = vadd.f32 %v106, %v137
    %v142 = vadd.f32 %v107, %v138
    %s143 = scalar_lea.vmem %s1, 3
    %v144 = vld [vmem:[%s143] ss:$4 sm:$0xf]
    %145 = vset.pattern.permute.xlu0 3
    %146 = vperm.xlu0 %145, %v41
    %v147 = vpop.permute.xlu0 %146
    %v150 = vlaneseq
    %v151 = vshrl.u32 %v150, 7
    %v152 = vsub.s32 0, %v151
    %v153 = vrot.slane %v144, %v152
    %v154 = vlaneseq
    %v155 = vshrl.u32 %v154, 7
    %v156 = vsub.s32 1, %v155
    %v157 = vrot.slane %v144, %v156
    %v158 = vlaneseq
    %v159 = vshrl.u32 %v158, 7
    %v160 = vsub.s32 2, %v159
    %v161 = vrot.slane %v144, %v160
    %v162 = vlaneseq
    %v163 = vshrl.u32 %v162, 7
    %v164 = vsub.s32 3, %v163
    %v165 = vrot.slane %v144, %v164
    %v170 = vmul.f32 %v147, %v153
    %v171 = vmul.f32 %v147, %v157
    %v172 = vmul.f32 %v147, %v161
    %v173 = vmul.f32 %v147, %v165
    %v174 = vadd.f32 %v139, %v170
    %v175 = vadd.f32 %v140, %v171
    %v176 = vadd.f32 %v141, %v172
    %v177 = vadd.f32 %v142, %v173
    %v178 = vld [vmem:[%s2] sm:$0xf]
    %v180 = vlaneseq
    %v181 = vshrl.u32 %v180, 7
    %v182 = vsub.s32 0, %v181
    %v183 = vrot.slane %v178, %v182
    %v184 = vlaneseq
    %v185 = vshrl.u32 %v184, 7
    %v186 = vsub.s32 1, %v185
    %v187 = vrot.slane %v178, %v186
    %v188 = vlaneseq
    %v189 = vshrl.u32 %v188, 7
    %v190 = vsub.s32 2, %v189
    %v191 = vrot.slane %v178, %v190
    %v192 = vlaneseq
    %v193 = vshrl.u32 %v192, 7
    %v194 = vsub.s32 3, %v193
    %v195 = vrot.slane %v178, %v194
    %v200 = vadd.f32 %v174, %v183
    %v201 = vadd.f32 %v175, %v187
    %v202 = vadd.f32 %v176, %v191
    %v203 = vadd.f32 %v177, %v195
    %v204 = vmax.f32 %v200, 0.0
    %v205 = vmax.f32 %v201, 0.0
    %v206 = vmax.f32 %v202, 0.0
    %v207 = vmax.f32 %v203, 0.0
    %v208 = vpack.c.bf16 %v204, %v204
    %v209 = vpack.c.bf16 %v205, %v205
    %v210 = vpack.c.bf16 %v206, %v206
    %v211 = vpack.c.bf16 %v207, %v207
    %v212 = vld [vmem:[#allocation2] sm:$0xff]
    %v213 = vld [vmem:[#allocation2 + $0x8] sm:$0xff]
    %v214 = vld [vmem:[#allocation2 + $0x10] sm:$0xff]
    %v215 = vld [vmem:[#allocation2 + $0x18] sm:$0xff]
    %v216 = vld [vmem:[#allocation2 + $0x20] sm:$0xff]
    %v217 = vld [vmem:[#allocation2 + $0x28] sm:$0xff]
    %v218 = vld [vmem:[#allocation2 + $0x30] sm:$0xff]
    %v219 = vld [vmem:[#allocation2 + $0x38] sm:$0xff]
    %v220 = vld [vmem:[#allocation2 + $0x40] sm:$0xff]
    %v221 = vld [vmem:[#allocation2 + $0x48] sm:$0xff]
    %v222 = vld [vmem:[#allocation2 + $0x50] sm:$0xff]
    %v223 = vld [vmem:[#allocation2 + $0x58] sm:$0xff]
    %v224 = vld [vmem:[#allocation2 + $0x60] sm:$0xff]
    %v225 = vld [vmem:[#allocation2 + $0x68] sm:$0xff]
    %v226 = vld [vmem:[#allocation2 + $0x70] sm:$0xff]
    %v227 = vld [vmem:[#allocation2 + $0x78] sm:$0xff]
    %v228 = vld [vmem:[#allocation2 + $0x80] sm:$0xff]
    %v229 = vld [vmem:[#allocation2 + $0x88] sm:$0xff]
    %v230 = vld [vmem:[#allocation2 + $0x90] sm:$0xff]
    %v231 = vld [vmem:[#allocation2 + $0x98] sm:$0xff]
    %v232 = vld [vmem:[#allocation2 + $0xa0] sm:$0xff]
    %v233 = vld [vmem:[#allocation2 + $0xa8] sm:$0xff]
    %v234 = vld [vmem:[#allocation2 + $0xb0] sm:$0xff]
    %v235 = vld [vmem:[#allocation2 + $0xb8] sm:$0xff]
    %v236 = vld [vmem:[#allocation2 + $0xc0] sm:$0xff]
    %v237 = vld [vmem:[#allocation2 + $0xc8] sm:$0xff]
    %v238 = vld [vmem:[#allocation2 + $0xd0] sm:$0xff]
    %v239 = vld [vmem:[#allocation2 + $0xd8] sm:$0xff]
    %v240 = vld [vmem:[#allocation2 + $0xe0] sm:$0xff]
    %v241 = vld [vmem:[#allocation2 + $0xe8] sm:$0xff]
    %v242 = vld [vmem:[#allocation2 + $0xf0] sm:$0xff]
    %v243 = vld [vmem:[#allocation2 + $0xf8] sm:$0xff]
    %v244 = vld [vmem:[#allocation2 + $0x100] sm:$0xff]
    %v245 = vld [vmem:[#allocation2 + $0x108] sm:$0xff]
    %v246 = vld [vmem:[#allocation2 + $0x110] sm:$0xff]
    %v247 = vld [vmem:[#allocation2 + $0x118] sm:$0xff]
    %v248 = vld [vmem:[#allocation2 + $0x120] sm:$0xff]
    %v249 = vld [vmem:[#allocation2 + $0x128] sm:$0xff]
    %v250 = vld [vmem:[#allocation2 + $0x130] sm:$0xff]
    %v251 = vld [vmem:[#allocation2 + $0x138] sm:$0xff]
    %v252 = vld [vmem:[#allocation2 + $0x140] sm:$0xff]
    %v253 = vld [vmem:[#allocation2 + $0x148] sm:$0xff]
    %v254 = vld [vmem:[#allocation2 + $0x150] sm:$0xff]
    %v255 = vld [vmem:[#allocation2 + $0x158] sm:$0xff]
    %v256 = vld [vmem:[#allocation2 + $0x160] sm:$0xff]
    %v257 = vld [vmem:[#allocation2 + $0x168] sm:$0xff]
    %v258 = vld [vmem:[#allocation2 + $0x170] sm:$0xff]
    %v259 = vld [vmem:[#allocation2 + $0x178] sm:$0xff]
    %v260 = vld [vmem:[#allocation2 + $0x180] sm:$0xff]
    %v261 = vld [vmem:[#allocation2 + $0x188] sm:$0xff]
    %v262 = vld [vmem:[#allocation2 + $0x190] sm:$0xff]
    %v263 = vld [vmem:[#allocation2 + $0x198] sm:$0xff]
    %v264 = vld [vmem:[#allocation2 + $0x1a0] sm:$0xff]
    %v265 = vld [vmem:[#allocation2 + $0x1a8] sm:$0xff]
    %v266 = vld [vmem:[#allocation2 + $0x1b0] sm:$0xff]
    %v267 = vld [vmem:[#allocation2 + $0x1b8] sm:$0xff]
    %v268 = vld [vmem:[#allocation2 + $0x1c0] sm:$0xff]
    %v269 = vld [vmem:[#allocation2 + $0x1c8] sm:$0xff]
    %v270 = vld [vmem:[#allocation2 + $0x1d0] sm:$0xff]
    %v271 = vld [vmem:[#allocation2 + $0x1d8] sm:$0xff]
    %v272 = vld [vmem:[#allocation2 + $0x1e0] sm:$0xff]
    %v273 = vld [vmem:[#allocation2 + $0x1e8] sm:$0xff]
    %v274 = vld [vmem:[#allocation2 + $0x1f0] sm:$0xff]
    %v275 = vld [vmem:[#allocation2 + $0x1f8] sm:$0xff]
    %v276 = vld [vmem:[#allocation2 + $0x200] sm:$0xff]
    %v277 = vld [vmem:[#allocation2 + $0x208] sm:$0xff]
    %v278 = vld [vmem:[#allocation2 + $0x210] sm:$0xff]
    %v279 = vld [vmem:[#allocation2 + $0x218] sm:$0xff]
    %v280 = vld [vmem:[#allocation2 + $0x220] sm:$0xff]
    %v281 = vld [vmem:[#allocation2 + $0x228] sm:$0xff]
    %v282 = vld [vmem:[#allocation2 + $0x230] sm:$0xff]
    %v283 = vld [vmem:[#allocation2 + $0x238] sm:$0xff]
    %v284 = vld [vmem:[#allocation2 + $0x240] sm:$0xff]
    %v285 = vld [vmem:[#allocation2 + $0x248] sm:$0xff]
    %v286 = vld [vmem:[#allocation2 + $0x250] sm:$0xff]
    %v287 = vld [vmem:[#allocation2 + $0x258] sm:$0xff]
    %v288 = vld [vmem:[#allocation2 + $0x260] sm:$0xff]
    %v289 = vld [vmem:[#allocation2 + $0x268] sm:$0xff]
    %v290 = vld [vmem:[#allocation2 + $0x270] sm:$0xff]
    %v291 = vld [vmem:[#allocation2 + $0x278] sm:$0xff]
    %v292 = vld [vmem:[#allocation2 + $0x280] sm:$0xff]
    %v293 = vld [vmem:[#allocation2 + $0x288] sm:$0xff]
    %v294 = vld [vmem:[#allocation2 + $0x290] sm:$0xff]
    %v295 = vld [vmem:[#allocation2 + $0x298] sm:$0xff]
    %v296 = vld [vmem:[#allocation2 + $0x2a0] sm:$0xff]
    %v297 = vld [vmem:[#allocation2 + $0x2a8] sm:$0xff]
    %v298 = vld [vmem:[#allocation2 + $0x2b0] sm:$0xff]
    %v299 = vld [vmem:[#allocation2 + $0x2b8] sm:$0xff]
    %v300 = vld [vmem:[#allocation2 + $0x2c0] sm:$0xff]
    %v301 = vld [vmem:[#allocation2 + $0x2c8] sm:$0xff]
    %v302 = vld [vmem:[#allocation2 + $0x2d0] sm:$0xff]
    %v303 = vld [vmem:[#allocation2 + $0x2d8] sm:$0xff]
    %v304 = vld [vmem:[#allocation2 + $0x2e0] sm:$0xff]
    %v305 = vld [vmem:[#allocation2 + $0x2e8] sm:$0xff]
    %v306 = vld [vmem:[#allocation2 + $0x2f0] sm:$0xff]
    %v307 = vld [vmem:[#allocation2 + $0x2f8] sm:$0xff]
    %v308 = vld [vmem:[#allocation2 + $0x300] sm:$0xff]
    %v309 = vld [vmem:[#allocation2 + $0x308] sm:$0xff]
    %v310 = vld [vmem:[#allocation2 + $0x310] sm:$0xff]
    %v311 = vld [vmem:[#allocation2 + $0x318] sm:$0xff]
    %v312 = vld [vmem:[#allocation2 + $0x320] sm:$0xff]
    %v313 = vld [vmem:[#allocation2 + $0x328] sm:$0xff]
    %v314 = vld [vmem:[#allocation2 + $0x330] sm:$0xff]
    %v315 = vld [vmem:[#allocation2 + $0x338] sm:$0xff]
    %v316 = vld [vmem:[#allocation2 + $0x340] sm:$0xff]
    %v317 = vld [vmem:[#allocation2 + $0x348] sm:$0xff]
    %v318 = vld [vmem:[#allocation2 + $0x350] sm:$0xff]
    %v319 = vld [vmem:[#allocation2 + $0x358] sm:$0xff]
    %v320 = vld [vmem:[#allocation2 + $0x360] sm:$0xff]
    %v321 = vld [vmem:[#allocation2 + $0x368] sm:$0xff]
    %v322 = vld [vmem:[#allocation2 + $0x370] sm:$0xff]
    %v323 = vld [vmem:[#allocation2 + $0x378] sm:$0xff]
    %v324 = vld [vmem:[#allocation2 + $0x380] sm:$0xff]
    %v325 = vld [vmem:[#allocation2 + $0x388] sm:$0xff]
    %v326 = vld [vmem:[#allocation2 + $0x390] sm:$0xff]
    %v327 = vld [vmem:[#allocation2 + $0x398] sm:$0xff]
    %v328 = vld [vmem:[#allocation2 + $0x3a0] sm:$0xff]
    %v329 = vld [vmem:[#allocation2 + $0x3a8] sm:$0xff]
    %v330 = vld [vmem:[#allocation2 + $0x3b0] sm:$0xff]
    %v331 = vld [vmem:[#allocation2 + $0x3b8] sm:$0xff]
    %v332 = vld [vmem:[#allocation2 + $0x3c0] sm:$0xff]
    %v333 = vld [vmem:[#allocation2 + $0x3c8] sm:$0xff]
    %v334 = vld [vmem:[#allocation2 + $0x3d0] sm:$0xff]
    %v335 = vld [vmem:[#allocation2 + $0x3d8] sm:$0xff]
    %v336 = vld [vmem:[#allocation2 + $0x3e0] sm:$0xff]
    %v337 = vld [vmem:[#allocation2 + $0x3e8] sm:$0xff]
    %v338 = vld [vmem:[#allocation2 + $0x3f0] sm:$0xff]
    %v339 = vld [vmem:[#allocation2 + $0x3f8] sm:$0xff]
    %v340 = vld [vmem:[%s4] sm:$0xf]
    %v342 = vlaneseq
    %v343 = vshrl.u32 %v342, 7
    %v344 = vsub.s32 0, %v343
    %v345 = vrot.slane %v340, %v344
    %v346 = vlaneseq
    %v347 = vshrl.u32 %v346, 7
    %v348 = vsub.s32 1, %v347
    %v349 = vrot.slane %v340, %v348
    %v350 = vlaneseq
    %v351 = vshrl.u32 %v350, 7
    %v352 = vsub.s32 2, %v351
    %v353 = vrot.slane %v340, %v352
    %v354 = vlaneseq
    %v355 = vshrl.u32 %v354, 7
    %v356 = vsub.s32 3, %v355
    %v357 = vrot.slane %v340, %v356
    %v490 = vunpack.c.l.b16 %v212
    %v491 = vunpack.c.h.b16 %v212
    %v492 = vunpack.c.l.b16 %v213
    %v493 = vunpack.c.h.b16 %v213
    %v494 = vunpack.c.l.b16 %v214
    %v495 = vunpack.c.h.b16 %v214
    %v496 = vunpack.c.l.b16 %v215
    %v497 = vunpack.c.h.b16 %v215
    %v498 = vunpack.c.l.b16 %v216
    %v499 = vunpack.c.h.b16 %v216
    %v500 = vunpack.c.l.b16 %v217
    %v501 = vunpack.c.h.b16 %v217
    %v502 = vunpack.c.l.b16 %v218
    %v503 = vunpack.c.h.b16 %v218
    %v504 = vunpack.c.l.b16 %v219
    %v505 = vunpack.c.h.b16 %v219
    %v506 = vunpack.c.l.b16 %v220
    %v507 = vunpack.c.h.b16 %v220
    %v508 = vunpack.c.l.b16 %v221
    %v509 = vunpack.c.h.b16 %v221
    %v510 = vunpack.c.l.b16 %v222
    %v511 = vunpack.c.h.b16 %v222
    %v512 = vunpack.c.l.b16 %v223
    %v513 = vunpack.c.h.b16 %v223
    %v514 = vunpack.c.l.b16 %v224
    %v515 = vunpack.c.h.b16 %v224
    %v516 = vunpack.c.l.b16 %v225
    %v517 = vunpack.c.h.b16 %v225
    %v518 = vunpack.c.l.b16 %v226
    %v519 = vunpack.c.h.b16 %v226
    %v520 = vunpack.c.l.b16 %v227
    %v521 = vunpack.c.h.b16 %v227
    %v522 = vunpack.c.l.b16 %v228
    %v523 = vunpack.c.h.b16 %v228
    %v524 = vunpack.c.l.b16 %v229
    %v525 = vunpack.c.h.b16 %v229
    %v526 = vunpack.c.l.b16 %v230
    %v527 = vunpack.c.h.b16 %v230
    %v528 = vunpack.c.l.b16 %v231
    %v529 = vunpack.c.h.b16 %v231
    %v530 = vunpack.c.l.b16 %v232
    %v531 = vunpack.c.h.b16 %v232
    %v532 = vunpack.c.l.b16 %v233
    %v533 = vunpack.c.h.b16 %v233
    %v534 = vunpack.c.l.b16 %v234
    %v535 = vunpack.c.h.b16 %v234
    %v536 = vunpack.c.l.b16 %v235
    %v537 = vunpack.c.h.b16 %v235
    %v538 = vunpack.c.l.b16 %v236
    %v539 = vunpack.c.h.b16 %v236
    %v540 = vunpack.c.l.b16 %v237
    %v541 = vunpack.c.h.b16 %v237
    %v542 = vunpack.c.l.b16 %v238
    %v543 = vunpack.c.h.b16 %v238
    %v544 = vunpack.c.l.b16 %v239
    %v545 = vunpack.c.h.b16 %v239
    %v546 = vunpack.c.l.b16 %v240
    %v547 = vunpack.c.h.b16 %v240
    %v548 = vunpack.c.l.b16 %v241
    %v549 = vunpack.c.h.b16 %v241
    %v550 = vunpack.c.l.b16 %v242
    %v551 = vunpack.c.h.b16 %v242
    %v552 = vunpack.c.l.b16 %v243
    %v553 = vunpack.c.h.b16 %v243
    %v554 = vunpack.c.l.b16 %v244
    %v555 = vunpack.c.h.b16 %v244
    %v556 = vunpack.c.l.b16 %v245
    %v557 = vunpack.c.h.b16 %v245
    %v558 = vunpack.c.l.b16 %v246
    %v559 = vunpack.c.h.b16 %v246
    %v560 = vunpack.c.l.b16 %v247
    %v561 = vunpack.c.h.b16 %v247
    %v562 = vunpack.c.l.b16 %v248
    %v563 = vunpack.c.h.b16 %v248
    %v564 = vunpack.c.l.b16 %v249
    %v565 = vunpack.c.h.b16 %v249
    %v566 = vunpack.c.l.b16 %v250
    %v567 = vunpack.c.h.b16 %v250
    %v568 = vunpack.c.l.b16 %v251
    %v569 = vunpack.c.h.b16 %v251
    %v570 = vunpack.c.l.b16 %v252
    %v571 = vunpack.c.h.b16 %v252
    %v572 = vunpack.c.l.b16 %v253
    %v573 = vunpack.c.h.b16 %v253
    %v574 = vunpack.c.l.b16 %v254
    %v575 = vunpack.c.h.b16 %v254
    %v576 = vunpack.c.l.b16 %v255
    %v577 = vunpack.c.h.b16 %v255
    %v578 = vunpack.c.l.b16 %v256
    %v579 = vunpack.c.h.b16 %v256
    %v580 = vunpack.c.l.b16 %v257
    %v581 = vunpack.c.h.b16 %v257
    %v582 = vunpack.c.l.b16 %v258
    %v583 = vunpack.c.h.b16 %v258
    %v584 = vunpack.c.l.b16 %v259
    %v585 = vunpack.c.h.b16 %v259
    %v586 = vunpack.c.l.b16 %v260
    %v587 = vunpack.c.h.b16 %v260
    %v588 = vunpack.c.l.b16 %v261
    %v589 = vunpack.c.h.b16 %v261
    %v590 = vunpack.c.l.b16 %v262
    %v591 = vunpack.c.h.b16 %v262
    %v592 = vunpack.c.l.b16 %v263
    %v593 = vunpack.c.h.b16 %v263
    %v594 = vunpack.c.l.b16 %v264
    %v595 = vunpack.c.h.b16 %v264
    %v596 = vunpack.c.l.b16 %v265
    %v597 = vunpack.c.h.b16 %v265
    %v598 = vunpack.c.l.b16 %v266
    %v599 = vunpack.c.h.b16 %v266
    %v600 = vunpack.c.l.b16 %v267
    %v601 = vunpack.c.h.b16 %v267
    %v602 = vunpack.c.l.b16 %v268
    %v603 = vunpack.c.h.b16 %v268
    %v604 = vunpack.c.l.b16 %v269
    %v605 = vunpack.c.h.b16 %v269
    %v606 = vunpack.c.l.b16 %v270
    %v607 = vunpack.c.h.b16 %v270
    %v608 = vunpack.c.l.b16 %v271
    %v609 = vunpack.c.h.b16 %v271
    %v610 = vunpack.c.l.b16 %v272
    %v611 = vunpack.c.h.b16 %v272
    %v612 = vunpack.c.l.b16 %v273
    %v613 = vunpack.c.h.b16 %v273
    %v614 = vunpack.c.l.b16 %v274
    %v615 = vunpack.c.h.b16 %v274
    %v616 = vunpack.c.l.b16 %v275
    %v617 = vunpack.c.h.b16 %v275
    %v618 = vunpack.c.l.b16 %v276
    %v619 = vunpack.c.h.b16 %v276
    %v620 = vunpack.c.l.b16 %v277
    %v621 = vunpack.c.h.b16 %v277
    %v622 = vunpack.c.l.b16 %v278
    %v623 = vunpack.c.h.b16 %v278
    %v624 = vunpack.c.l.b16 %v279
    %v625 = vunpack.c.h.b16 %v279
    %v626 = vunpack.c.l.b16 %v280
    %v627 = vunpack.c.h.b16 %v280
    %v628 = vunpack.c.l.b16 %v281
    %v629 = vunpack.c.h.b16 %v281
    %v630 = vunpack.c.l.b16 %v282
    %v631 = vunpack.c.h.b16 %v282
    %v632 = vunpack.c.l.b16 %v283
    %v633 = vunpack.c.h.b16 %v283
    %v634 = vunpack.c.l.b16 %v284
    %v635 = vunpack.c.h.b16 %v284
    %v636 = vunpack.c.l.b16 %v285
    %v637 = vunpack.c.h.b16 %v285
    %v638 = vunpack.c.l.b16 %v286
    %v639 = vunpack.c.h.b16 %v286
    %v640 = vunpack.c.l.b16 %v287
    %v641 = vunpack.c.h.b16 %v287
    %v642 = vunpack.c.l.b16 %v288
    %v643 = vunpack.c.h.b16 %v288
    %v644 = vunpack.c.l.b16 %v289
    %v645 = vunpack.c.h.b16 %v289
    %v646 = vunpack.c.l.b16 %v290
    %v647 = vunpack.c.h.b16 %v290
    %v648 = vunpack.c.l.b16 %v291
    %v649 = vunpack.c.h.b16 %v291
    %v650 = vunpack.c.l.b16 %v292
    %v651 = vunpack.c.h.b16 %v292
    %v652 = vunpack.c.l.b16 %v293
    %v653 = vunpack.c.h.b16 %v293
    %v654 = vunpack.c.l.b16 %v294
    %v655 = vunpack.c.h.b16 %v294
    %v656 = vunpack.c.l.b16 %v295
    %v657 = vunpack.c.h.b16 %v295
    %v658 = vunpack.c.l.b16 %v296
    %v659 = vunpack.c.h.b16 %v296
    %v660 = vunpack.c.l.b16 %v297
    %v661 = vunpack.c.h.b16 %v297
    %v662 = vunpack.c.l.b16 %v298
    %v663 = vunpack.c.h.b16 %v298
    %v664 = vunpack.c.l.b16 %v299
    %v665 = vunpack.c.h.b16 %v299
    %v666 = vunpack.c.l.b16 %v300
    %v667 = vunpack.c.h.b16 %v300
    %v668 = vunpack.c.l.b16 %v301
    %v669 = vunpack.c.h.b16 %v301
    %v670 = vunpack.c.l.b16 %v302
    %v671 = vunpack.c.h.b16 %v302
    %v672 = vunpack.c.l.b16 %v303
    %v673 = vunpack.c.h.b16 %v303
    %v674 = vunpack.c.l.b16 %v304
    %v675 = vunpack.c.h.b16 %v304
    %v676 = vunpack.c.l.b16 %v305
    %v677 = vunpack.c.h.b16 %v305
    %v678 = vunpack.c.l.b16 %v306
    %v679 = vunpack.c.h.b16 %v306
    %v680 = vunpack.c.l.b16 %v307
    %v681 = vunpack.c.h.b16 %v307
    %v682 = vunpack.c.l.b16 %v308
    %v683 = vunpack.c.h.b16 %v308
    %v684 = vunpack.c.l.b16 %v309
    %v685 = vunpack.c.h.b16 %v309
    %v686 = vunpack.c.l.b16 %v310
    %v687 = vunpack.c.h.b16 %v310
    %v688 = vunpack.c.l.b16 %v311
    %v689 = vunpack.c.h.b16 %v311
    %v690 = vunpack.c.l.b16 %v312
    %v691 = vunpack.c.h.b16 %v312
    %v692 = vunpack.c.l.b16 %v313
    %v693 = vunpack.c.h.b16 %v313
    %v694 = vunpack.c.l.b16 %v314
    %v695 = vunpack.c.h.b16 %v314
    %v696 = vunpack.c.l.b16 %v315
    %v697 = vunpack.c.h.b16 %v315
    %v698 = vunpack.c.l.b16 %v316
    %v699 = vunpack.c.h.b16 %v316
    %v700 = vunpack.c.l.b16 %v317
    %v701 = vunpack.c.h.b16 %v317
    %v702 = vunpack.c.l.b16 %v318
    %v703 = vunpack.c.h.b16 %v318
    %v704 = vunpack.c.l.b16 %v319
    %v705 = vunpack.c.h.b16 %v319
    %v706 = vunpack.c.l.b16 %v320
    %v707 = vunpack.c.h.b16 %v320
    %v708 = vunpack.c.l.b16 %v321
    %v709 = vunpack.c.h.b16 %v321
    %v710 = vunpack.c.l.b16 %v322
    %v711 = vunpack.c.h.b16 %v322
    %v712 = vunpack.c.l.b16 %v323
    %v713 = vunpack.c.h.b16 %v323
    %v714 = vunpack.c.l.b16 %v324
    %v715 = vunpack.c.h.b16 %v324
    %v716 = vunpack.c.l.b16 %v325
    %v717 = vunpack.c.h.b16 %v325
    %v718 = vunpack.c.l.b16 %v326
    %v719 = vunpack.c.h.b16 %v326
    %v720 = vunpack.c.l.b16 %v327
    %v721 = vunpack.c.h.b16 %v327
    %v722 = vunpack.c.l.b16 %v328
    %v723 = vunpack.c.h.b16 %v328
    %v724 = vunpack.c.l.b16 %v329
    %v725 = vunpack.c.h.b16 %v329
    %v726 = vunpack.c.l.b16 %v330
    %v727 = vunpack.c.h.b16 %v330
    %v728 = vunpack.c.l.b16 %v331
    %v729 = vunpack.c.h.b16 %v331
    %v730 = vunpack.c.l.b16 %v332
    %v731 = vunpack.c.h.b16 %v332
    %v732 = vunpack.c.l.b16 %v333
    %v733 = vunpack.c.h.b16 %v333
    %v734 = vunpack.c.l.b16 %v334
    %v735 = vunpack.c.h.b16 %v334
    %v736 = vunpack.c.l.b16 %v335
    %v737 = vunpack.c.h.b16 %v335
    %v738 = vunpack.c.l.b16 %v336
    %v739 = vunpack.c.h.b16 %v336
    %v740 = vunpack.c.l.b16 %v337
    %v741 = vunpack.c.h.b16 %v337
    %v742 = vunpack.c.l.b16 %v338
    %v743 = vunpack.c.h.b16 %v338
    %v744 = vunpack.c.l.b16 %v339
    %v745 = vunpack.c.h.b16 %v339
    %v746 = vpack.c.b16 %v494, %v490
    %v747 = vpack.c.b16 %v495, %v491
    %v748 = vpack.c.b16 %v496, %v492
    %v749 = vpack.c.b16 %v497, %v493
    %v750 = vpack.c.b16 %v502, %v498
    %v751 = vpack.c.b16 %v503, %v499
    %v752 = vpack.c.b16 %v504, %v500
    %v753 = vpack.c.b16 %v505, %v501
    %v754 = vpack.c.b16 %v510, %v506
    %v755 = vpack.c.b16 %v511, %v507
    %v756 = vpack.c.b16 %v512, %v508
    %v757 = vpack.c.b16 %v513, %v509
    %v758 = vpack.c.b16 %v518, %v514
    %v759 = vpack.c.b16 %v519, %v515
    %v760 = vpack.c.b16 %v520, %v516
    %v761 = vpack.c.b16 %v521, %v517
    %v762 = vpack.c.b16 %v526, %v522
    %v763 = vpack.c.b16 %v527, %v523
    %v764 = vpack.c.b16 %v528, %v524
    %v765 = vpack.c.b16 %v529, %v525
    %v766 = vpack.c.b16 %v534, %v530
    %v767 = vpack.c.b16 %v535, %v531
    %v768 = vpack.c.b16 %v536, %v532
    %v769 = vpack.c.b16 %v537, %v533
    %v770 = vpack.c.b16 %v542, %v538
    %v771 = vpack.c.b16 %v543, %v539
    %v772 = vpack.c.b16 %v544, %v540
    %v773 = vpack.c.b16 %v545, %v541
    %v774 = vpack.c.b16 %v550, %v546
    %v775 = vpack.c.b16 %v551, %v547
    %v776 = vpack.c.b16 %v552, %v548
    %v777 = vpack.c.b16 %v553, %v549
    %v778 = vpack.c.b16 %v558, %v554
    %v779 = vpack.c.b16 %v559, %v555
    %v780 = vpack.c.b16 %v560, %v556
    %v781 = vpack.c.b16 %v561, %v557
    %v782 = vpack.c.b16 %v566, %v562
    %v783 = vpack.c.b16 %v567, %v563
    %v784 = vpack.c.b16 %v568, %v564
    %v785 = vpack.c.b16 %v569, %v565
    %v786 = vpack.c.b16 %v574, %v570
    %v787 = vpack.c.b16 %v575, %v571
    %v788 = vpack.c.b16 %v576, %v572
    %v789 = vpack.c.b16 %v577, %v573
    %v790 = vpack.c.b16 %v582, %v578
    %v791 = vpack.c.b16 %v583, %v579
    %v792 = vpack.c.b16 %v584, %v580
    %v793 = vpack.c.b16 %v585, %v581
    %v794 = vpack.c.b16 %v590, %v586
    %v795 = vpack.c.b16 %v591, %v587
    %v796 = vpack.c.b16 %v592, %v588
    %v797 = vpack.c.b16 %v593, %v589
    %v798 = vpack.c.b16 %v598, %v594
    %v799 = vpack.c.b16 %v599, %v595
    %v800 = vpack.c.b16 %v600, %v596
    %v801 = vpack.c.b16 %v601, %v597
    %v802 = vpack.c.b16 %v606, %v602
    %v803 = vpack.c.b16 %v607, %v603
    %v804 = vpack.c.b16 %v608, %v604
    %v805 = vpack.c.b16 %v609, %v605
    %v806 = vpack.c.b16 %v614, %v610
    %v807 = vpack.c.b16 %v615, %v611
    %v808 = vpack.c.b16 %v616, %v612
    %v809 = vpack.c.b16 %v617, %v613
    %v810 = vpack.c.b16 %v622, %v618
    %v811 = vpack.c.b16 %v623, %v619
    %v812 = vpack.c.b16 %v624, %v620
    %v813 = vpack.c.b16 %v625, %v621
    %v814 = vpack.c.b16 %v630, %v626
    %v815 = vpack.c.b16 %v631, %v627
    %v816 = vpack.c.b16 %v632, %v628
    %v817 = vpack.c.b16 %v633, %v629
    %v818 = vpack.c.b16 %v638, %v634
    %v819 = vpack.c.b16 %v639, %v635
    %v820 = vpack.c.b16 %v640, %v636
    %v821 = vpack.c.b16 %v641, %v637
    %v822 = vpack.c.b16 %v646, %v642
    %v823 = vpack.c.b16 %v647, %v643
    %v824 = vpack.c.b16 %v648, %v644
    %v825 = vpack.c.b16 %v649, %v645
    %v826 = vpack.c.b16 %v654, %v650
    %v827 = vpack.c.b16 %v655, %v651
    %v828 = vpack.c.b16 %v656, %v652
    %v829 = vpack.c.b16 %v657, %v653
    %v830 = vpack.c.b16 %v662, %v658
    %v831 = vpack.c.b16 %v663, %v659
    %v832 = vpack.c.b16 %v664, %v660
    %v833 = vpack.c.b16 %v665, %v661
    %v834 = vpack.c.b16 %v670, %v666
    %v835 = vpack.c.b16 %v671, %v667
    %v836 = vpack.c.b16 %v672, %v668
    %v837 = vpack.c.b16 %v673, %v669
    %v838 = vpack.c.b16 %v678, %v674
    %v839 = vpack.c.b16 %v679, %v675
    %v840 = vpack.c.b16 %v680, %v676
    %v841 = vpack.c.b16 %v681, %v677
    %v842 = vpack.c.b16 %v686, %v682
    %v843 = vpack.c.b16 %v687, %v683
    %v844 = vpack.c.b16 %v688, %v684
    %v845 = vpack.c.b16 %v689, %v685
    %v846 = vpack.c.b16 %v694, %v690
    %v847 = vpack.c.b16 %v695, %v691
    %v848 = vpack.c.b16 %v696, %v692
    %v849 = vpack.c.b16 %v697, %v693
    %v850 = vpack.c.b16 %v702, %v698
    %v851 = vpack.c.b16 %v703, %v699
    %v852 = vpack.c.b16 %v704, %v700
    %v853 = vpack.c.b16 %v705, %v701
    %v854 = vpack.c.b16 %v710, %v706
    %v855 = vpack.c.b16 %v711, %v707
    %v856 = vpack.c.b16 %v712, %v708
    %v857 = vpack.c.b16 %v713, %v709
    %v858 = vpack.c.b16 %v718, %v714
    %v859 = vpack.c.b16 %v719, %v715
    %v860 = vpack.c.b16 %v720, %v716
    %v861 = vpack.c.b16 %v721, %v717
    %v862 = vpack.c.b16 %v726, %v722
    %v863 = vpack.c.b16 %v727, %v723
    %v864 = vpack.c.b16 %v728, %v724
    %v865 = vpack.c.b16 %v729, %v725
    %v866 = vpack.c.b16 %v734, %v730
    %v867 = vpack.c.b16 %v735, %v731
    %v868 = vpack.c.b16 %v736, %v732
    %v869 = vpack.c.b16 %v737, %v733
    %v870 = vpack.c.b16 %v742, %v738
    %v871 = vpack.c.b16 %v743, %v739
    %v872 = vpack.c.b16 %v744, %v740
    %v873 = vpack.c.b16 %v745, %v741
    %1002 = vmatprep.subr.bf16.mxu0 %v747
    %1003 = vmatpush1.bf16.msra.mxu0 %v746
    %1004 = vmatprep.subr.bf16.mxu0 %v751
    %1005 = vmatpush1.bf16.msra.mxu0 %v750
    %1006 = vmatprep.subr.bf16.mxu0 %v755
    %1007 = vmatpush1.bf16.msra.mxu0 %v754
    %1008 = vmatprep.subr.bf16.mxu0 %v759
    %1009 = vmatpush1.bf16.msra.mxu0 %v758
    %1010 = vmatprep.subr.bf16.mxu0 %v763
    %1011 = vmatpush1.bf16.msra.mxu0 %v762
    %1012 = vmatprep.subr.bf16.mxu0 %v767
    %1013 = vmatpush1.bf16.msra.mxu0 %v766
    %1014 = vmatprep.subr.bf16.mxu0 %v771
    %1015 = vmatpush1.bf16.msra.mxu0 %v770
    %1016 = vmatprep.subr.bf16.mxu0 %v775
    %1017 = vmatpush1.bf16.msra.mxu0 %v774
    %1018 = vmatprep.subr.bf16.mxu0 %v779
    %1019 = vmatpush1.bf16.msra.mxu0 %v778
    %1020 = vmatprep.subr.bf16.mxu0 %v783
    %1021 = vmatpush1.bf16.msra.mxu0 %v782
    %1022 = vmatprep.subr.bf16.mxu0 %v787
    %1023 = vmatpush1.bf16.msra.mxu0 %v786
    %1024 = vmatprep.subr.bf16.mxu0 %v791
    %1025 = vmatpush1.bf16.msra.mxu0 %v790
    %1026 = vmatprep.subr.bf16.mxu0 %v795
    %1027 = vmatpush1.bf16.msra.mxu0 %v794
    %1028 = vmatprep.subr.bf16.mxu0 %v799
    %1029 = vmatpush1.bf16.msra.mxu0 %v798
    %1030 = vmatprep.subr.bf16.mxu0 %v803
    %1031 = vmatpush1.bf16.msra.mxu0 %v802
    %1032 = vmatprep.subr.bf16.mxu0 %v807
    %1033 = vmatpush1.bf16.msra.mxu0 %v806
    %1034 = vmatprep.mubr.bf16.mxu0 %v209
    %1035 = vmatmul.mubr.bf16.gmra.mrb[0].mxu0 %v208
    %v1036 = vpop.f32.mrb[0].mxu0
    %v1037 = vadd.f32 %v345, %v1036
    %v1038 = vpop.f32.mrb[0].mxu0
    %v1039 = vadd.f32 %v349, %v1038
    %v1040 = vpop.f32.mrb[0].mxu0
    %v1041 = vpop.f32.mrb[0].mxu0
    %1042 = vdwg.mxu0
    %1043 = vmatprep.subr.bf16.mxu0 %v811
    %1044 = vmatpush1.bf16.msra.mxu0 %v810
    %1045 = vmatprep.subr.bf16.mxu0 %v815
    %1046 = vmatpush1.bf16.msra.mxu0 %v814
    %1047 = vmatprep.subr.bf16.mxu0 %v819
    %1048 = vmatpush1.bf16.msra.mxu0 %v818
    %1049 = vmatprep.subr.bf16.mxu0 %v823
    %1050 = vmatpush1.bf16.msra.mxu0 %v822
    %1051 = vmatprep.subr.bf16.mxu0 %v827
    %1052 = vmatpush1.bf16.msra.mxu0 %v826
    %1053 = vmatprep.subr.bf16.mxu0 %v831
    %1054 = vmatpush1.bf16.msra.mxu0 %v830
    %1055 = vmatprep.subr.bf16.mxu0 %v835
    %1056 = vmatpush1.bf16.msra.mxu0 %v834
    %1057 = vmatprep.subr.bf16.mxu0 %v839
    %1058 = vmatpush1.bf16.msra.mxu0 %v838
    %1059 = vmatprep.subr.bf16.mxu0 %v843
    %1060 = vmatpush1.bf16.msra.mxu0 %v842
    %1061 = vmatprep.subr.bf16.mxu0 %v847
    %1062 = vmatpush1.bf16.msra.mxu0 %v846
    %1063 = vmatprep.subr.bf16.mxu0 %v851
    %1064 = vmatpush1.bf16.msra.mxu0 %v850
    %1065 = vmatprep.subr.bf16.mxu0 %v855
    %1066 = vmatpush1.bf16.msra.mxu0 %v854
    %1067 = vmatprep.subr.bf16.mxu0 %v859
    %1068 = vmatpush1.bf16.msra.mxu0 %v858
    %1069 = vmatprep.subr.bf16.mxu0 %v863
    %1070 = vmatpush1.bf16.msra.mxu0 %v862
    %1071 = vmatprep.subr.bf16.mxu0 %v867
    %1072 = vmatpush1.bf16.msra.mxu0 %v866
    %1073 = vmatprep.subr.bf16.mxu0 %v871
    %1074 = vmatpush1.bf16.msra.mxu0 %v870
    %1075 = vmatprep.mubr.bf16.mxu0 %v211
    %1076 = vmatmul.mubr.bf16.gmra.mrb[0].mxu0 %v210
    %v1077 = vpop.f32.mrb[0].mxu0
    %v1078 = vadd.f32 %v1037, %v1077
    %v1079 = vpop.f32.mrb[0].mxu0
    %v1080 = vadd.f32 %v1039, %v1079
    %v1081 = vpop.f32.mrb[0].mxu0
    %v1082 = vpop.f32.mrb[0].mxu0
    %1083 = vdwg.mxu0
    %1084 = vmatprep.subr.bf16.mxu0 %v749
    %1085 = vmatpush1.bf16.msra.mxu0 %v748
    %1086 = vmatprep.subr.bf16.mxu0 %v753
    %1087 = vmatpush1.bf16.msra.mxu0 %v752
    %1088 = vmatprep.subr.bf16.mxu0 %v757
    %1089 = vmatpush1.bf16.msra.mxu0 %v756
    %1090 = vmatprep.subr.bf16.mxu0 %v761
    %1091 = vmatpush1.bf16.msra.mxu0 %v760
    %1092 = vmatprep.subr.bf16.mxu0 %v765
    %1093 = vmatpush1.bf16.msra.mxu0 %v764
    %1094 = vmatprep.subr.bf16.mxu0 %v769
    %1095 = vmatpush1.bf16.msra.mxu0 %v768
    %1096 = vmatprep.subr.bf16.mxu0 %v773
    %1097 = vmatpush1.bf16.msra.mxu0 %v772
    %1098 = vmatprep.subr.bf16.mxu0 %v777
    %1099 = vmatpush1.bf16.msra.mxu0 %v776
    %1100 = vmatprep.subr.bf16.mxu0 %v781
    %1101 = vmatpush1.bf16.msra.mxu0 %v780
    %1102 = vmatprep.subr.bf16.mxu0 %v785
    %1103 = vmatpush1.bf16.msra.mxu0 %v784
    %1104 = vmatprep.subr.bf16.mxu0 %v789
    %1105 = vmatpush1.bf16.msra.mxu0 %v788
    %1106 = vmatprep.subr.bf16.mxu0 %v793
    %1107 = vmatpush1.bf16.msra.mxu0 %v792
    %1108 = vmatprep.subr.bf16.mxu0 %v797
    %1109 = vmatpush1.bf16.msra.mxu0 %v796
    %1110 = vmatprep.subr.bf16.mxu0 %v801
    %1111 = vmatpush1.bf16.msra.mxu0 %v800
    %1112 = vmatprep.subr.bf16.mxu0 %v805
    %1113 = vmatpush1.bf16.msra.mxu0 %v804
    %1114 = vmatprep.subr.bf16.mxu0 %v809
    %1115 = vmatpush1.bf16.msra.mxu0 %v808
    %1116 = vmatprep.mubr.bf16.mxu0 %v209
    %1117 = vmatmul.mubr.bf16.gmra.mrb[0].mxu0 %v208
    %v1118 = vpop.f32.mrb[0].mxu0
    %v1119 = vadd.f32 %v353, %v1118
    %v1120 = vpop.f32.mrb[0].mxu0
    %v1121 = vadd.f32 %v357, %v1120
    %v1122 = vpop.f32.mrb[0].mxu0
    %v1123 = vpop.f32.mrb[0].mxu0
    %1124 = vdwg.mxu0
    %1125 = vmatprep.subr.bf16.mxu0 %v813
    %1126 = vmatpush1.bf16.msra.mxu0 %v812
    %1127 = vmatprep.subr.bf16.mxu0 %v817
    %1128 = vmatpush1.bf16.msra.mxu0 %v816
    %1129 = vmatprep.subr.bf16.mxu0 %v821
    %1130 = vmatpush1.bf16.msra.mxu0 %v820
    %1131 = vmatprep.subr.bf16.mxu0 %v825
    %1132 = vmatpush1.bf16.msra.mxu0 %v824
    %1133 = vmatprep.subr.bf16.mxu0 %v829
    %1134 = vmatpush1.bf16.msra.mxu0 %v828
    %1135 = vmatprep.subr.bf16.mxu0 %v833
    %1136 = vmatpush1.bf16.msra.mxu0 %v832
    %1137 = vmatprep.subr.bf16.mxu0 %v837
    %1138 = vmatpush1.bf16.msra.mxu0 %v836
    %1139 = vmatprep.subr.bf16.mxu0 %v841
    %1140 = vmatpush1.bf16.msra.mxu0 %v840
    %1141 = vmatprep.subr.bf16.mxu0 %v845
    %1142 = vmatpush1.bf16.msra.mxu0 %v844
    %1143 = vmatprep.subr.bf16.mxu0 %v849
    %1144 = vmatpush1.bf16.msra.mxu0 %v848
    %1145 = vmatprep.subr.bf16.mxu0 %v853
    %1146 = vmatpush1.bf16.msra.mxu0 %v852
    %1147 = vmatprep.subr.bf16.mxu0 %v857
    %1148 = vmatpush1.bf16.msra.mxu0 %v856
    %1149 = vmatprep.subr.bf16.mxu0 %v861
    %1150 = vmatpush1.bf16.msra.mxu0 %v860
    %1151 = vmatprep.subr.bf16.mxu0 %v865
    %1152 = vmatpush1.bf16.msra.mxu0 %v864
    %1153 = vmatprep.subr.bf16.mxu0 %v869
    %1154 = vmatpush1.bf16.msra.mxu0 %v868
    %1155 = vmatprep.subr.bf16.mxu0 %v873
    %1156 = vmatpush1.bf16.msra.mxu0 %v872
    %1157 = vmatprep.mubr.bf16.mxu0 %v211
    %1158 = vmatmul.mubr.bf16.gmra.mrb[0].mxu0 %v210
    %v1159 = vpop.f32.mrb[0].mxu0
    %v1160 = vadd.f32 %v1119, %v1159
    %v1161 = vpop.f32.mrb[0].mxu0
    %v1162 = vadd.f32 %v1121, %v1161
    %v1163 = vpop.f32.mrb[0].mxu0
    %v1164 = vpop.f32.mrb[0].mxu0
    %1165 = vdwg.mxu0
    %v1166 = vmax.f32 %v1078, 0.0
    %v1167 = vmax.f32 %v1080, 0.0
    %v1168 = vmax.f32 %v1160, 0.0
    %v1169 = vmax.f32 %v1162, 0.0
    %v1170 = vpack.c.bf16 %v1166, %v1166
    %v1171 = vpack.c.bf16 %v1167, %v1167
    %v1172 = vpack.c.bf16 %v1168, %v1168
    %v1173 = vpack.c.bf16 %v1169, %v1169
    %v1174 = vld [vmem:[%s5] sm:$0xf]
    %v1175 = vld [vmem:[%s5 + $0x4] sm:$0xf]
    %v1176 = vld [vmem:[%s5 + $0x8] sm:$0xf]
    %v1177 = vld [vmem:[%s5 + $0xc] sm:$0xf]
    %v1178 = vld [vmem:[%s5 + $0x10] sm:$0xf]
    %v1179 = vld [vmem:[%s5 + $0x14] sm:$0xf]
    %v1180 = vld [vmem:[%s5 + $0x18] sm:$0xf]
    %v1181 = vld [vmem:[%s5 + $0x1c] sm:$0xf]
    %v1182 = vld [vmem:[%s5 + $0x20] sm:$0xf]
    %v1183 = vld [vmem:[%s5 + $0x24] sm:$0xf]
    %v1184 = vld [vmem:[%s5 + $0x28] sm:$0xf]
    %v1185 = vld [vmem:[%s5 + $0x2c] sm:$0xf]
    %v1186 = vld [vmem:[%s5 + $0x30] sm:$0xf]
    %v1187 = vld [vmem:[%s5 + $0x34] sm:$0xf]
    %v1188 = vld [vmem:[%s5 + $0x38] sm:$0xf]
    %v1189 = vld [vmem:[%s5 + $0x3c] sm:$0xf]
    %v1190 = vld [vmem:[%s5 + $0x40] sm:$0xf]
    %v1191 = vld [vmem:[%s5 + $0x44] sm:$0xf]
    %v1192 = vld [vmem:[%s5 + $0x48] sm:$0xf]
    %v1193 = vld [vmem:[%s5 + $0x4c] sm:$0xf]
    %v1194 = vld [vmem:[%s5 + $0x50] sm:$0xf]
    %v1195 = vld [vmem:[%s5 + $0x54] sm:$0xf]
    %v1196 = vld [vmem:[%s5 + $0x58] sm:$0xf]
    %v1197 = vld [vmem:[%s5 + $0x5c] sm:$0xf]
    %v1198 = vld [vmem:[%s5 + $0x60] sm:$0xf]
    %v1199 = vld [vmem:[%s5 + $0x64] sm:$0xf]
    %v1200 = vld [vmem:[%s5 + $0x68] sm:$0xf]
    %v1201 = vld [vmem:[%s5 + $0x6c] sm:$0xf]
    %v1202 = vld [vmem:[%s5 + $0x70] sm:$0xf]
    %v1203 = vld [vmem:[%s5 + $0x74] sm:$0xf]
    %v1204 = vld [vmem:[%s5 + $0x78] sm:$0xf]
    %v1205 = vld [vmem:[%s5 + $0x7c] sm:$0xf]
    %v1206 = vld [vmem:[%s5 + $0x80] sm:$0xf]
    %v1207 = vld [vmem:[%s5 + $0x84] sm:$0xf]
    %v1208 = vld [vmem:[%s5 + $0x88] sm:$0xf]
    %v1209 = vld [vmem:[%s5 + $0x8c] sm:$0xf]
    %v1210 = vld [vmem:[%s5 + $0x90] sm:$0xf]
    %v1211 = vld [vmem:[%s5 + $0x94] sm:$0xf]
    %v1212 = vld [vmem:[%s5 + $0x98] sm:$0xf]
    %v1213 = vld [vmem:[%s5 + $0x9c] sm:$0xf]
    %v1214 = vld [vmem:[%s5 + $0xa0] sm:$0xf]
    %v1215 = vld [vmem:[%s5 + $0xa4] sm:$0xf]
    %v1216 = vld [vmem:[%s5 + $0xa8] sm:$0xf]
    %v1217 = vld [vmem:[%s5 + $0xac] sm:$0xf]
    %v1218 = vld [vmem:[%s5 + $0xb0] sm:$0xf]
    %v1219 = vld [vmem:[%s5 + $0xb4] sm:$0xf]
    %v1220 = vld [vmem:[%s5 + $0xb8] sm:$0xf]
    %v1221 = vld [vmem:[%s5 + $0xbc] sm:$0xf]
    %v1222 = vld [vmem:[%s5 + $0xc0] sm:$0xf]
    %v1223 = vld [vmem:[%s5 + $0xc4] sm:$0xf]
    %v1224 = vld [vmem:[%s5 + $0xc8] sm:$0xf]
    %v1225 = vld [vmem:[%s5 + $0xcc] sm:$0xf]
    %v1226 = vld [vmem:[%s5 + $0xd0] sm:$0xf]
    %v1227 = vld [vmem:[%s5 + $0xd4] sm:$0xf]
    %v1228 = vld [vmem:[%s5 + $0xd8] sm:$0xf]
    %v1229 = vld [vmem:[%s5 + $0xdc] sm:$0xf]
    %v1230 = vld [vmem:[%s5 + $0xe0] sm:$0xf]
    %v1231 = vld [vmem:[%s5 + $0xe4] sm:$0xf]
    %v1232 = vld [vmem:[%s5 + $0xe8] sm:$0xf]
    %v1233 = vld [vmem:[%s5 + $0xec] sm:$0xf]
    %v1234 = vld [vmem:[%s5 + $0xf0] sm:$0xf]
    %v1235 = vld [vmem:[%s5 + $0xf4] sm:$0xf]
    %v1236 = vld [vmem:[%s5 + $0xf8] sm:$0xf]
    %v1237 = vld [vmem:[%s5 + $0xfc] sm:$0xf]
    %v1238 = vld [vmem:[%s6] sm:$0x1]
    %v1240 = vlaneseq
    %v1241 = vshrl.u32 %v1240, 7
    %v1242 = vsub.s32 0, %v1241
    %v1243 = vrot.slane %v1238, %v1242
    %v1309 = vunpack.c.l.b16 %v1174
    %v1310 = vunpack.c.l.b16 %v1175
    %v1311 = vunpack.c.l.b16 %v1176
    %v1312 = vunpack.c.l.b16 %v1177
    %v1313 = vunpack.c.l.b16 %v1178
    %v1314 = vunpack.c.l.b16 %v1179
    %v1315 = vunpack.c.l.b16 %v1180
    %v1316 = vunpack.c.l.b16 %v1181
    %v1317 = vunpack.c.l.b16 %v1182
    %v1318 = vunpack.c.l.b16 %v1183
    %v1319 = vunpack.c.l.b16 %v1184
    %v1320 = vunpack.c.l.b16 %v1185
    %v1321 = vunpack.c.l.b16 %v1186
    %v1322 = vunpack.c.l.b16 %v1187
    %v1323 = vunpack.c.l.b16 %v1188
    %v1324 = vunpack.c.l.b16 %v1189
    %v1325 = vunpack.c.l.b16 %v1190
    %v1326 = vunpack.c.l.b16 %v1191
    %v1327 = vunpack.c.l.b16 %v1192
    %v1328 = vunpack.c.l.b16 %v1193
    %v1329 = vunpack.c.l.b16 %v1194
    %v1330 = vunpack.c.l.b16 %v1195
    %v1331 = vunpack.c.l.b16 %v1196
    %v1332 = vunpack.c.l.b16 %v1197
    %v1333 = vunpack.c.l.b16 %v1198
    %v1334 = vunpack.c.l.b16 %v1199
    %v1335 = vunpack.c.l.b16 %v1200
    %v1336 = vunpack.c.l.b16 %v1201
    %v1337 = vunpack.c.l.b16 %v1202
    %v1338 = vunpack.c.l.b16 %v1203
    %v1339 = vunpack.c.l.b16 %v1204
    %v1340 = vunpack.c.l.b16 %v1205
    %v1341 = vunpack.c.l.b16 %v1206
    %v1342 = vunpack.c.l.b16 %v1207
    %v1343 = vunpack.c.l.b16 %v1208
    %v1344 = vunpack.c.l.b16 %v1209
    %v1345 = vunpack.c.l.b16 %v1210
    %v1346 = vunpack.c.l.b16 %v1211
    %v1347 = vunpack.c.l.b16 %v1212
    %v1348 = vunpack.c.l.b16 %v1213
    %v1349 = vunpack.c.l.b16 %v1214
    %v1350 = vunpack.c.l.b16 %v1215
    %v1351 = vunpack.c.l.b16 %v1216
    %v1352 = vunpack.c.l.b16 %v1217
    %v1353 = vunpack.c.l.b16 %v1218
    %v1354 = vunpack.c.l.b16 %v1219
    %v1355 = vunpack.c.l.b16 %v1220
    %v1356 = vunpack.c.l.b16 %v1221
    %v1357 = vunpack.c.l.b16 %v1222
    %v1358 = vunpack.c.l.b16 %v1223
    %v1359 = vunpack.c.l.b16 %v1224
    %v1360 = vunpack.c.l.b16 %v1225
    %v1361 = vunpack.c.l.b16 %v1226
    %v1362 = vunpack.c.l.b16 %v1227
    %v1363 = vunpack.c.l.b16 %v1228
    %v1364 = vunpack.c.l.b16 %v1229
    %v1365 = vunpack.c.l.b16 %v1230
    %v1366 = vunpack.c.l.b16 %v1231
    %v1367 = vunpack.c.l.b16 %v1232
    %v1368 = vunpack.c.l.b16 %v1233
    %v1369 = vunpack.c.l.b16 %v1234
    %v1370 = vunpack.c.l.b16 %v1235
    %v1371 = vunpack.c.l.b16 %v1236
    %v1372 = vunpack.c.l.b16 %v1237
    %v1373 = vpack.c.b16 %v1310, %v1309
    %v1374 = vpack.c.b16 %v1312, %v1311
    %v1375 = vpack.c.b16 %v1314, %v1313
    %v1376 = vpack.c.b16 %v1316, %v1315
    %v1377 = vpack.c.b16 %v1318, %v1317
    %v1378 = vpack.c.b16 %v1320, %v1319
    %v1379 = vpack.c.b16 %v1322, %v1321
    %v1380 = vpack.c.b16 %v1324, %v1323
    %v1381 = vpack.c.b16 %v1326, %v1325
    %v1382 = vpack.c.b16 %v1328, %v1327
    %v1383 = vpack.c.b16 %v1330, %v1329
    %v1384 = vpack.c.b16 %v1332, %v1331
    %v1385 = vpack.c.b16 %v1334, %v1333
    %v1386 = vpack.c.b16 %v1336, %v1335
    %v1387 = vpack.c.b16 %v1338, %v1337
    %v1388 = vpack.c.b16 %v1340, %v1339
    %v1389 = vpack.c.b16 %v1342, %v1341
    %v1390 = vpack.c.b16 %v1344, %v1343
    %v1391 = vpack.c.b16 %v1346, %v1345
    %v1392 = vpack.c.b16 %v1348, %v1347
    %v1393 = vpack.c.b16 %v1350, %v1349
    %v1394 = vpack.c.b16 %v1352, %v1351
    %v1395 = vpack.c.b16 %v1354, %v1353
    %v1396 = vpack.c.b16 %v1356, %v1355
    %v1397 = vpack.c.b16 %v1358, %v1357
    %v1398 = vpack.c.b16 %v1360, %v1359
    %v1399 = vpack.c.b16 %v1362, %v1361
    %v1400 = vpack.c.b16 %v1364, %v1363
    %v1401 = vpack.c.b16 %v1366, %v1365
    %v1402 = vpack.c.b16 %v1368, %v1367
    %v1403 = vpack.c.b16 %v1370, %v1369
    %v1404 = vpack.c.b16 %v1372, %v1371
    %1437 = vmatprep.subr.bf16.mxu0 0
    %1438 = vmatpush1.bf16.msra.mxu0 %v1373
    %1439 = vmatprep.subr.bf16.mxu0 0
    %1440 = vmatpush1.bf16.msra.mxu0 %v1374
    %1441 = vmatprep.subr.bf16.mxu0 0
    %1442 = vmatpush1.bf16.msra.mxu0 %v1375
    %1443 = vmatprep.subr.bf16.mxu0 0
    %1444 = vmatpush1.bf16.msra.mxu0 %v1376
    %1445 = vmatprep.subr.bf16.mxu0 0
    %1446 = vmatpush1.bf16.msra.mxu0 %v1377
    %1447 = vmatprep.subr.bf16.mxu0 0
    %1448 = vmatpush1.bf16.msra.mxu0 %v1378
    %1449 = vmatprep.subr.bf16.mxu0 0
    %1450 = vmatpush1.bf16.msra.mxu0 %v1379
    %1451 = vmatprep.subr.bf16.mxu0 0
    %1452 = vmatpush1.bf16.msra.mxu0 %v1380
    %1453 = vmatprep.subr.bf16.mxu0 0
    %1454 = vmatpush1.bf16.msra.mxu0 %v1381
    %1455 = vmatprep.subr.bf16.mxu0 0
    %1456 = vmatpush1.bf16.msra.mxu0 %v1382
    %1457 = vmatprep.subr.bf16.mxu0 0
    %1458 = vmatpush1.bf16.msra.mxu0 %v1383
    %1459 = vmatprep.subr.bf16.mxu0 0
    %1460 = vmatpush1.bf16.msra.mxu0 %v1384
    %1461 = vmatprep.subr.bf16.mxu0 0
    %1462 = vmatpush1.bf16.msra.mxu0 %v1385
    %1463 = vmatprep.subr.bf16.mxu0 0
    %1464 = vmatpush1.bf16.msra.mxu0 %v1386
    %1465 = vmatprep.subr.bf16.mxu0 0
    %1466 = vmatpush1.bf16.msra.mxu0 %v1387
    %1467 = vmatprep.subr.bf16.mxu0 0
    %1468 = vmatpush1.bf16.msra.mxu0 %v1388
    %1469 = vmatprep.mubr.bf16.mxu0 %v1171
    %1470 = vmatmul.mubr.bf16.gmra.mrb[0].mxu0 %v1170
    %v1471 = vpop.f32.mrb[0].mxu0
    %v1472 = vadd.f32 %v1243, %v1471
    %v1473 = vpop.f32.mrb[0].mxu0
    %v1474 = vpop.f32.mrb[0].mxu0
    %v1475 = vpop.f32.mrb[0].mxu0
    %1476 = vdwg.mxu0
    %1477 = vmatprep.subr.bf16.mxu0 0
    %1478 = vmatpush1.bf16.msra.mxu0 %v1389
    %1479 = vmatprep.subr.bf16.mxu0 0
    %1480 = vmatpush1.bf16.msra.mxu0 %v1390
    %1481 = vmatprep.subr.bf16.mxu0 0
    %1482 = vmatpush1.bf16.msra.mxu0 %v1391
    %1483 = vmatprep.subr.bf16.mxu0 0
    %1484 = vmatpush1.bf16.msra.mxu0 %v1392
    %1485 = vmatprep.subr.bf16.mxu0 0
    %1486 = vmatpush1.bf16.msra.mxu0 %v1393
    %1487 = vmatprep.subr.bf16.mxu0 0
    %1488 = vmatpush1.bf16.msra.mxu0 %v1394
    %1489 = vmatprep.subr.bf16.mxu0 0
    %1490 = vmatpush1.bf16.msra.mxu0 %v1395
    %1491 = vmatprep.subr.bf16.mxu0 0
    %1492 = vmatpush1.bf16.msra.mxu0 %v1396
    %1493 = vmatprep.subr.bf16.mxu0 0
    %1494 = vmatpush1.bf16.msra.mxu0 %v1397
    %1495 = vmatprep.subr.bf16.mxu0 0
    %1496 = vmatpush1.bf16.msra.mxu0 %v1398
    %1497 = vmatprep.subr.bf16.mxu0 0
    %1498 = vmatpush1.bf16.msra.mxu0 %v1399
    %1499 = vmatprep.subr.bf16.mxu0 0
    %1500 = vmatpush1.bf16.msra.mxu0 %v1400
    %1501 = vmatprep.subr.bf16.mxu0 0
    %1502 = vmatpush1.bf16.msra.mxu0 %v1401
    %1503 = vmatprep.subr.bf16.mxu0 0
    %1504 = vmatpush1.bf16.msra.mxu0 %v1402
    %1505 = vmatprep.subr.bf16.mxu0 0
    %1506 = vmatpush1.bf16.msra.mxu0 %v1403
    %1507 = vmatprep.subr.bf16.mxu0 0
    %1508 = vmatpush1.bf16.msra.mxu0 %v1404
    %1509 = vmatprep.mubr.bf16.mxu0 %v1173
    %1510 = vmatmul.mubr.bf16.gmra.mrb[0].mxu0 %v1172
    %v1511 = vpop.f32.mrb[0].mxu0
    %v1512 = vadd.f32 %v1472, %v1511
    %v1513 = vpop.f32.mrb[0].mxu0
    %v1514 = vpop.f32.mrb[0].mxu0
    %v1515 = vpop.f32.mrb[0].mxu0
    %1516 = vdwg.mxu0
    %v1517 = vtanh.pop %v1512
    %v1518 = vmul.f32 %v1517, 3.5
    %v1519 = vadd.f32 %v1518, -1.5
    %v1520 = vlaneseq
    %v1521 = vand.u32 %v1520, 127
    %vm1522 = vcmp.lt.s32.totalorder %v1521, 1
    %v1523 = vsel %vm1522, %v1512, %v1519
    %vm1524 = vcmask 15360
    %1525 = vst.msk [vmem:[%s7] sm:$0xff] %vm1524, %v1523
    // Predicated region
    $region34: #{tpu_custom_call.1} parent=1 // pred_check
      _
    $region35: #{tpu_custom_call.1} parent=1 // pred_check_branch
      %1527 = sbr.rel (0) target = $region37
    $region36: #{tpu_custom_call.1} parent=1 // pred_region
      _
    $region37: #{tpu_custom_call.1} parent=1 // pred_fallthru
      _
    // Predicated region
    $region38: #{tpu_custom_call.1} parent=1 // pred_check
      _
    $region39: #{tpu_custom_call.1} parent=1 // pred_check_branch
      %1529 = sbr.rel (0) target = $region41
    $region40: #{tpu_custom_call.1} parent=1 // pred_region
      _
    $region41: #{tpu_custom_call.1} parent=1 // pred_fallthru
      _
    %1530 = vsyncpa [#allocation3], 1

</llo_original>
